<compile_context>
chip_gen: v5e
topology: v5e:2x2
jax: 0.10.0
libtpu: 0.0.40
codegen_flags: <defaults>
</compile_context>

<pallas_src>
import jax
import jax.numpy as jnp
from jax.experimental import pallas as pl
from jax.experimental.pallas import tpu as pltpu


def _round_up(n, m):
    return ((n + m - 1) // m) * m


def _time2vector_kernel(x_ref, p_ref, lin_ref, per_ref):
    # x_ref: (TB, TS, F); p_ref: (4, TS); lin_ref / per_ref: (TB, TS).
    x = x_ref[...].astype(jnp.float32)          # in-kernel upcast (VPU)
    xm = jnp.mean(x, axis=-1)                   # (TB, TS) cross-lane reduce (XLU)

    p = p_ref[...]                              # (4, TS) f32
    wl = p[0:1, :]                              # each (1, TS); broadcasts over TB
    bl = p[1:2, :]
    wp = p[2:3, :]
    bp = p[3:4, :]

    # Lane-dense stores: S sits on the lane axis -> full-width vst.
    lin_ref[...] = (wl * xm + bl).astype(lin_ref.dtype)
    per_ref[...] = jnp.sin(xm * wp + bp).astype(per_ref.dtype)   # sin -> EUP slot


def _pick_tiles(B, S, F, itemsize, budget_bytes):
    """Pick (TB, TS) so the PADDED x block fits `budget_bytes` of VMEM."""
    sublane = 8 * max(1, 4 // max(itemsize, 1))   # f32 -> 8, bf16 -> 16, int8 -> 32
    lane_f = _round_up(F, 128)                    # lane (last-dim) padding

    ts = S if S <= 512 else 512                   # full S, or a multiple of 128

    def padded_row_bytes(t):
        return _round_up(t, sublane) * lane_f * itemsize

    # If even 8 batch rows at this TS blow the budget, shrink TS (stays /128).
    while S > ts > 128 and 8 * padded_row_bytes(ts) > budget_bytes:
        ts //= 2

    row = padded_row_bytes(ts)
    rows_fit = max(1, budget_bytes // row)
    if B <= rows_fit:
        tb = B                                    # full batch dim: always legal
    else:
        tb = max(8, (rows_fit // 8) * 8)          # keep sublane alignment

    # Ensure v7x's two TensorCores both get grid steps on a "parallel" axis
    # (only when it keeps the output block sublane-aligned).
    if S <= ts and B <= tb and B >= 16:
        tb = max(8, ((B // 2) // 8) * 8)
    return tb, ts


def time2vector_parts(x, weights_linear, bias_linear, weights_periodic, bias_periodic):
    """x: (B, S, F) -> (linear, periodic), each (B, S) float32."""
    B, S, F = x.shape
    itemsize = jnp.dtype(x.dtype).itemsize

    # One stacked (4, S) f32 param array -> a single small DMA per grid step.
    params = jnp.stack(
        [
            weights_linear.astype(jnp.float32),
            bias_linear.astype(jnp.float32),
            weights_periodic.astype(jnp.float32),
            bias_periodic.astype(jnp.float32),
        ],
        axis=0,
    )

    # ~2 MiB *padded* x block: >=85% of HBM roofline for streaming kernels and
    # double-buffers comfortably inside every generation's scoped VMEM
    # (16 MiB v5e default, 32 MiB v6e/v7x default, 64 MiB v7x physical).
    budget = 2 * 1024 * 1024
    TB, TS = _pick_tiles(B, S, F, itemsize, budget)

    # Grid: seq tiles outer, batch tiles inner -> param block index constant
    # across consecutive steps (no redundant param refetch per batch tile).
    grid = (pl.cdiv(S, TS), pl.cdiv(B, TB))

    x_spec = pl.BlockSpec((TB, TS, F), lambda s, b: (b, s, 0))
    p_spec = pl.BlockSpec((4, TS), lambda s, b: (0, s))
    out_spec = pl.BlockSpec((TB, TS), lambda s, b: (b, s))

    # Explicit VMEM limit sized from the padded, double-buffered footprint.
    sublane = 8 * max(1, 4 // max(itemsize, 1))
    x_blk = TB * _round_up(TS, sublane) * _round_up(F, 128) * itemsize
    p_blk = 8 * _round_up(TS, 128) * 4
    o_blk = _round_up(TB, 8) * _round_up(TS, 128) * 4
    vmem_need = 2 * (x_blk + p_blk + 2 * o_blk)
    vmem_limit = int(min(max(vmem_need + (4 << 20), 16 << 20), 48 << 20))

    cost = pl.CostEstimate(
        flops=B * S * (F + 4),
        transcendentals=B * S,
        bytes_accessed=B * S * F * itemsize + 4 * S * 4 + 2 * B * S * 4,
    )

    lin, per = pl.pallas_call(
        _time2vector_kernel,
        out_shape=(
            jax.ShapeDtypeStruct((B, S), jnp.float32),
            jax.ShapeDtypeStruct((B, S), jnp.float32),
        ),
        grid=grid,
        in_specs=[x_spec, p_spec],
        out_specs=(out_spec, out_spec),
        compiler_params=pltpu.CompilerParams(
            dimension_semantics=("parallel", "parallel"),
            vmem_limit_bytes=vmem_limit,
        ),
        cost_estimate=cost,
    )(x, params)
    return lin, per


def time2vector(x, weights_linear, bias_linear, weights_periodic, bias_periodic):
    """Matches Time2Vector.forward: (B, S, F) -> (B, S, 2) float32."""
    lin, per = time2vector_parts(
        x, weights_linear, bias_linear, weights_periodic, bias_periodic
    )
    # The module's exact (B, S, 2) layout needs a lane interleave; doing it in
    # the wrapper keeps the kernel's stores full-width.  Consumers that accept
    # (linear, periodic) separately should use time2vector_parts() instead and
    # skip this extra HBM pass.
    return jnp.stack([lin, per], axis=-1)


def time2vector_ref(x, wl, bl, wp, bp):
    xm = jnp.mean(x.astype(jnp.float32), axis=-1)
    lin = wl * xm + bl
    per = jnp.sin(xm * wp + bp)
    return jnp.concatenate([lin[..., None], per[..., None]], axis=-1)


if __name__ == "__main__":
    batch, seq_len, features = 2, 8, 32

    key = jax.random.PRNGKey(0)
    kx, kwl, kbl, kwp, kbp = jax.random.split(key, 5)

    x = jax.random.normal(kx, (batch, seq_len, features), dtype=jnp.float32)

    # nn.init.uniform_ -> U[0, 1), shape (seq_len,)
    weights_linear = jax.random.uniform(kwl, (seq_len,), dtype=jnp.float32)
    bias_linear = jax.random.uniform(kbl, (seq_len,), dtype=jnp.float32)
    weights_periodic = jax.random.uniform(kwp, (seq_len,), dtype=jnp.float32)
    bias_periodic = jax.random.uniform(kbp, (seq_len,), dtype=jnp.float32)

    out = time2vector(x, weights_linear, bias_linear, weights_periodic, bias_periodic)
    out = jax.block_until_ready(out)

    ref = time2vector_ref(x, weights_linear, bias_linear, weights_periodic, bias_periodic)
    assert out.shape == (batch, seq_len, 2), out.shape
    assert jnp.allclose(out, ref, atol=1e-5, rtol=1e-5), "mismatch vs JAX reference"

    print("KERNEL_OK")
</pallas_src>

<mosaic_0001>
module attributes {stable_mosaic.version = 11 : i64} {
  func.func @_time2vector_kernel(%arg0: i32, %arg1: i32, %arg2: memref<2x8x32xf32, #tpu.memory_space<vmem>>, %arg3: memref<4x8xf32, #tpu.memory_space<vmem>>, %arg4: memref<2x8xf32, #tpu.memory_space<vmem>>, %arg5: memref<2x8xf32, #tpu.memory_space<vmem>>) attributes {dimension_semantics = [#tpu.dimension_semantics<parallel>, #tpu.dimension_semantics<parallel>], iteration_bounds = array<i64: 1, 1>, scalar_prefetch = 0 : i64, scratch_operands = 0 : i64, tpu.core_type = #tpu.core_type<tc>, window_params = [{transform_indices = @transform_0, window_bounds = array<i64: 2, 8, 32>}, {transform_indices = @transform_1, window_bounds = array<i64: 4, 8>}, {transform_indices = @transform_2, window_bounds = array<i64: 2, 8>}, {transform_indices = @transform_3, window_bounds = array<i64: 2, 8>}]} {
    %c0 = arith.constant 0 : index
    %c0_0 = arith.constant 0 : index
    %c0_1 = arith.constant 0 : index
    %0 = vector.load %arg2[%c0, %c0_0, %c0_1] : memref<2x8x32xf32, #tpu.memory_space<vmem>>, vector<2x8x32xf32>
    %cst = arith.constant dense<0.000000e+00> : vector<2x8xf32>
    %1 = vector.multi_reduction <add>, %0, %cst [2] : vector<2x8x32xf32> to vector<2x8xf32>
    %cst_2 = arith.constant 3.200000e+01 : f32
    %2 = vector.broadcast %cst_2 : f32 to vector<2x8xf32>
    %3 = arith.divf %1, %2 : vector<2x8xf32>
    %c0_3 = arith.constant 0 : index
    %c0_4 = arith.constant 0 : index
    %4 = vector.load %arg3[%c0_3, %c0_4] : memref<4x8xf32, #tpu.memory_space<vmem>>, vector<4x8xf32>
    %5 = vector.extract_strided_slice %4 {offsets = [0, 0], sizes = [1, 8], strides = [1, 1]} : vector<4x8xf32> to vector<1x8xf32>
    %6 = vector.extract_strided_slice %4 {offsets = [1, 0], sizes = [1, 8], strides = [1, 1]} : vector<4x8xf32> to vector<1x8xf32>
    %7 = vector.extract_strided_slice %4 {offsets = [2, 0], sizes = [1, 8], strides = [1, 1]} : vector<4x8xf32> to vector<1x8xf32>
    %8 = vector.extract_strided_slice %4 {offsets = [3, 0], sizes = [1, 8], strides = [1, 1]} : vector<4x8xf32> to vector<1x8xf32>
    %9 = vector.broadcast %5 : vector<1x8xf32> to vector<2x8xf32>
    %10 = arith.mulf %9, %3 : vector<2x8xf32>
    %11 = vector.broadcast %6 : vector<1x8xf32> to vector<2x8xf32>
    %12 = arith.addf %10, %11 : vector<2x8xf32>
    %c0_5 = arith.constant 0 : index
    %c0_6 = arith.constant 0 : index
    %13 = vector.load %arg4[%c0_5, %c0_6] : memref<2x8xf32, #tpu.memory_space<vmem>>, vector<2x8xf32>
    tpu.vector_store %arg4[%c0_5, %c0_6], %12 {strides = array<i32>} : memref<2x8xf32, #tpu.memory_space<vmem>>, vector<2x8xf32>,
    %14 = vector.broadcast %7 : vector<1x8xf32> to vector<2x8xf32>
    %15 = arith.mulf %3, %14 : vector<2x8xf32>
    %16 = vector.broadcast %8 : vector<1x8xf32> to vector<2x8xf32>
    %17 = arith.addf %15, %16 : vector<2x8xf32>
    %18 = math.sin %17 : vector<2x8xf32>
    %c0_7 = arith.constant 0 : index
    %c0_8 = arith.constant 0 : index
    %19 = vector.load %arg5[%c0_7, %c0_8] : memref<2x8xf32, #tpu.memory_space<vmem>>, vector<2x8xf32>
    tpu.vector_store %arg5[%c0_7, %c0_8], %18 {strides = array<i32>} : memref<2x8xf32, #tpu.memory_space<vmem>>, vector<2x8xf32>,
    return
  }
  func.func @transform_0(%arg0: i32, %arg1: i32) -> (i32, i32, i32) {
    %c0_i32 = arith.constant 0 : i32
    %c0_i32_0 = arith.constant 0 : i32
    return %arg1, %arg0, %c0_i32 : i32, i32, i32
  }
  func.func @transform_1(%arg0: i32, %arg1: i32) -> (i32, i32) {
    %c0_i32 = arith.constant 0 : i32
    %c0_i32_0 = arith.constant 0 : i32
    return %c0_i32, %arg0 : i32, i32
  }
  func.func @transform_2(%arg0: i32, %arg1: i32) -> (i32, i32) {
    %c0_i32 = arith.constant 0 : i32
    return %arg1, %arg0 : i32, i32
  }
  func.func @transform_3(%arg0: i32, %arg1: i32) -> (i32, i32) {
    %c0_i32 = arith.constant 0 : i32
    return %arg1, %arg0 : i32, i32
  }
}

</mosaic_0001>

<llo_original>
// kernel: tpu_custom_call.1
$region0: #{tpu_custom_call.1}
  #allocation0 [shape = 'u32[]', space=smem, size = 0x4, offset = 0x4, fixed_abs, tag = 'smem constant byte address 0x4 - core index']
  #allocation1 [shape = 'u32[72,128]{1,0:T(1,128)}', space=vmem, size = 0x9000, scoped, tag = 'internal scratch']
  %s0 = inlined_call_operand.hbm [shape: f32[2,8,32], index: 0, kind: input, shape index: {}]
  %s1 = inlined_call_operand.hbm [shape: f32[4,8], index: 1, kind: input, shape index: {}]
  %s2 = inlined_call_operand.hbm [shape: f32[2,8], index: 2, kind: output, shape index: {0}]
  %s3 = inlined_call_operand.hbm [shape: f32[2,8], index: 3, kind: output, shape index: {1}]
  %4 = xla_tuple %s2, %s3
  %s5 = sld [smem:[#allocation0]]
  $region34: #{tpu_custom_call.1} parent=0
    _
  %s7 = ssub.s32 1, %s5
  %s8 = scalar_select 0, %s7, %s5
  $region1: #{tpu_custom_call.1} parent=0
    #allocation2 [shape = 'u8[8192]{0}', space=vmem, size = 0x2000, scoped, tag = 'input window, operand 0, single buffered']
    #allocation3 [shape = 's32[1]{0}', space=sflag, size = 0x4, scoped, tag = 'scoped memory for tpu_custom_call.1']
    #allocation4 [shape = 's32[1]{0}', space=sflag, size = 0x4, scoped, tag = 'scoped memory for tpu_custom_call.1']
    #allocation5 [shape = 'u8[2048]{0}', space=vmem, size = 0x800, scoped, tag = 'input window, operand 1, single buffered']
    #allocation6 [shape = 's32[1]{0}', space=sflag, size = 0x4, scoped, tag = 'scoped memory for tpu_custom_call.1']
    #allocation7 [shape = 'u8[1024]{0}', space=vmem, size = 0x400, scoped, tag = 'output window, operand 0, single buffered']
    #allocation8 [shape = 'u8[1024]{0}', space=vmem, size = 0x400, scoped, tag = 'output window, operand 1, single buffered']
    #allocation9 [shape = 's32[1]{0}', space=sflag, size = 0x4, scoped, tag = 'scoped memory for tpu_custom_call.1']
    %9 = vsyncpa [#allocation3], 0
    %10 = vsyncpa [#allocation6], 0
    %11 = vsyncpa [#allocation4], 0
    %12 = vsyncpa [#allocation9], 0
    // Predicated region
    $region2: #{tpu_custom_call.1} parent=1 // pred_check
      _
    $region3: #{tpu_custom_call.1} parent=1 // pred_check_branch
      %14 = sbr.rel (0) target = $region5
    $region4: #{tpu_custom_call.1} parent=1 // pred_region
      %16 = vsyncadd [#allocation3], 0
      %s17 = sshll.u32 %s0, 4
      %s18 = int_to_ptr.hbm [resolvable:$true] %s17
      %s19 = sshll.u32 [#allocation2], 4
      %s20 = int_to_ptr.vmem [resolvable:$true] %s19
      %25 = dma.hbm_to_vmem [thread:$0]  %s18, 256, %s20, [#allocation3], 128, 128, 8
    $region5: #{tpu_custom_call.1} parent=1 // pred_fallthru
      _
    // Predicated region
    $region6: #{tpu_custom_call.1} parent=1 // pred_check
      _
    $region7: #{tpu_custom_call.1} parent=1 // pred_check_branch
      %27 = sbr.rel (0) target = $region9
    $region8: #{tpu_custom_call.1} parent=1 // pred_region
      %29 = vsyncadd [#allocation6], 0
      %s31 = sshll.u32 %s1, 4
      %s32 = int_to_ptr.hbm [resolvable:$true] %s31
      %s33 = sshll.u32 [#allocation5], 4
      %s34 = int_to_ptr.vmem [resolvable:$true] %s33
      %36 = dma.hbm_to_vmem [thread:$0]  %s32, 64, %s34, [#allocation6]
    $region9: #{tpu_custom_call.1} parent=1 // pred_fallthru
      _
    // Predicated region
    $region10: #{tpu_custom_call.1} parent=1 // pred_check
      _
    $region11: #{tpu_custom_call.1} parent=1 // pred_check_branch
      %38 = sbr.rel (0) target = $region13
    $region12: #{tpu_custom_call.1} parent=1 // pred_region
      %40 = dma.done [#allocation3], 256
    $region13: #{tpu_custom_call.1} parent=1 // pred_fallthru
      _
    // Predicated region
    $region14: #{tpu_custom_call.1} parent=1 // pred_check
      _
    $region15: #{tpu_custom_call.1} parent=1 // pred_check_branch
      %42 = sbr.rel (0) target = $region17
    $region16: #{tpu_custom_call.1} parent=1 // pred_region
      %44 = dma.done [#allocation6], 64
    $region17: #{tpu_custom_call.1} parent=1 // pred_fallthru
      _
    %v45 = vld [vmem:[#allocation2] sm:$0xff]
    %v46 = vld [vmem:[#allocation2 + $0x8] sm:$0xff]
    %vm47 = vcmask 261120
    %v48 = vsel %vm47, %v45, 0.0
    %49 = vadd.xlane.f32.xlu0 %v48
    %v50 = vpop.xlane.xlu0 %49
    %v51 = vsel %vm47, %v46, 0.0
    %52 = vadd.xlane.f32.xlu0 %v51
    %v53 = vpop.xlane.xlu0 %52
    %v54 = vrcp.pop 32.0
    %v55 = vmul.f32 32.0, %v54
    %v56 = vsub.f32 1.0, %v55
    %v57 = vmul.f32 %v54, %v56
    %v58 = vadd.f32 %v54, %v57
    %vm59 = vweird.f32 %v54
    %v60 = vsel %vm59, %v54, %v58
    %v61 = vmul.f32 %v50, %v60
    %v62 = vmul.f32 %v53, %v60
    %v63 = vld [vmem:[#allocation5] sm:$0xf]
    %v64 = vperm.slane %v63, 0
    %v67 = vlaneseq
    %v68 = vand.u32 %v67, 127
    %v69 = vperm.slane %v61, %v68
    %v70 = vperm.slane %v62, %v68
    %vm71 = vcmask 1041409
    %v72 = vsel %vm71, %v70, %v69
    %v74 = vmul.f32 %v64, %v72
    %v75 = vperm.slane %v63, 1
    %v76 = vadd.f32 %v74, %v75
    %vm77 = vcmask 58368
    %78 = vst.msk [vmem:[#allocation7] sm:$0x3] %vm77, %v76
    %v79 = vperm.slane %v63, 2
    %v81 = vlaneseq
    %v82 = vshrl.u32 %v81, 7
    %84 = vset.pattern.permute.xlu0 %v82
    %85 = vperm.xlu0 %84, %v79
    %v86 = vpop.permute.xlu0 %85
    %v88 = vmul.f32 %v61, %v86
    %v89 = vmul.f32 %v62, %v86
    %v90 = vperm.slane %v63, 3
    %v92 = vlaneseq
    %v93 = vshrl.u32 %v92, 7
    %95 = vset.pattern.permute.xlu0 %v93
    %96 = vperm.xlu0 %95, %v90
    %v97 = vpop.permute.xlu0 %96
    %v99 = vadd.f32 %v88, %v97
    %v100 = vadd.f32 %v89, %v97
    %v101 = vand.u32 2147483647, %v99
    %vm102 = vcmp.le.f32.partialorder %v101, 0.7853982
    %vm103 = vcmp.lt.s32.totalorder %v99, 0
    %v104 = vand.u32 %v99, 2139095040
    %v105 = vshrl.u32 %v104, 23
    %v106 = vsub.s32 %v105, 127
    %v107 = vand.u32 2147483647, %v99
    %v108 = vand.u32 %v107, 8388607
    %v109 = vor.u32 %v108, 8388608
    %v110 = vsub.s32 0, %v109
    %v111 = vadd.s32 %v106, 1
    %vm112 = vcmp.gt.s32.totalorder %v111, 0
    %v113 = vsel %vm112, %v111, 0
    %v114 = vshrl.u32 %v113, 5
    %v115 = vand.u32 %v113, 31
    %v116 = vsub.s32 32, %v115
    %v117 = vshrl.u32 683565275, %v116
    %v118 = vshll.u32 683565275, %v115
    %v119 = vshrl.u32 2475754826, %v116
    %v120 = vor.u32 %v118, %v119
    %v121 = vshll.u32 2475754826, %v115
    %v122 = vshrl.u32 2131351028, %v116
    %v123 = vor.u32 %v121, %v122
    %v124 = vshll.u32 2131351028, %v115
    %v125 = vshrl.u32 2102212464, %v116
    %v126 = vor.u32 %v124, %v125
    %v127 = vshll.u32 2102212464, %v115
    %v128 = vshrl.u32 920167782, %v116
    %v129 = vor.u32 %v127, %v128
    %v130 = vshll.u32 920167782, %v115
    %v131 = vshrl.u32 1326507024, %v116
    %v132 = vor.u32 %v130, %v131
    %vm133 = vcmp.lt.s32.totalorder %v114, 1
    %vm134 = vcmp.lt.s32.totalorder %v114, 2
    %vm135 = vcmp.lt.s32.totalorder %v114, 3
    %vm136 = vcmp.lt.s32.totalorder %v114, 4
    %v137 = vsel %vm133, %v117, %v120
    %v138 = vsel %vm136, %v126, 2102212464
    %v139 = vsel %vm135, %v123, %v138
    %v140 = vsel %vm134, %v137, %v139
    %v141 = vsel %vm133, %v120, %v123
    %v142 = vsel %vm136, %v129, 920167782
    %v143 = vsel %vm135, %v126, %v142
    %v144 = vsel %vm134, %v141, %v143
    %v145 = vsel %vm133, %v123, %v126
    %v146 = vsel %vm136, %v132, 1326507024
    %v147 = vsel %vm135, %v129, %v146
    %v148 = vsel %vm134, %v145, %v147
    %v149 = vshll.u32 %v109, 8
    %v150 = vand.u32 %v149, 65535
    %v151 = vshrl.u32 %v149, 16
    %v152 = vand.u32 %v148, 65535
    %v153 = vshrl.u32 %v148, 16
    %v154 = vmul.u32 %v150, %v152
    %v155 = vmul.u32 %v150, %v153
    %v156 = vmul.u32 %v151, %v152
    %v157 = vmul.u32 %v151, %v153
    %v158 = vshll.u32 %v155, 16
    %v159 = vshrl.u32 %v155, 16
    %v160 = vshll.u32 %v156, 16
    %v161 = vshrl.u32 %v156, 16
    %vm162 = vc.u32 %v154, %v158
    %v163 = vsel %vm162, 1, 0
    %v164 = vadd.s32 %v154, %v158
    %v165 = vadd.s32 %v157, %v163
    %vm166 = vc.u32 %v164, %v160
    %v167 = vsel %vm166, 1, 0
    %v168 = vadd.s32 %v164, %v160
    %v169 = vadd.s32 %v165, %v167
    %v170 = vadd.s32 %v169, %v159
    %v171 = vadd.s32 %v170, %v161
    %v172 = vand.u32 %v149, 65535
    %v173 = vshrl.u32 %v149, 16
    %v174 = vand.u32 %v144, 65535
    %v175 = vshrl.u32 %v144, 16
    %v176 = vmul.u32 %v172, %v174
    %v177 = vmul.u32 %v172, %v175
    %v178 = vmul.u32 %v173, %v174
    %v179 = vmul.u32 %v173, %v175
    %v180 = vshll.u32 %v177, 16
    %v181 = vshrl.u32 %v177, 16
    %v182 = vshll.u32 %v178, 16
    %v183 = vshrl.u32 %v178, 16
    %vm184 = vc.u32 %v176, %v180
    %v185 = vsel %vm184, 1, 0
    %v186 = vadd.s32 %v176, %v180
    %v187 = vadd.s32 %v179, %v185
    %vm188 = vc.u32 %v186, %v182
    %v189 = vsel %vm188, 1, 0
    %v190 = vadd.s32 %v186, %v182
    %v191 = vadd.s32 %v187, %v189
    %v192 = vadd.s32 %v191, %v181
    %v193 = vadd.s32 %v192, %v183
    %v194 = vmul.u32 %v149, %v140
    %v195 = vadd.s32 %v171, %v190
    %vm196 = vc.u32 %v171, %v190
    %v197 = vadd.s32 %v193, 1
    %v198 = vsel %vm196, %v197, %v193
    %v199 = vadd.s32 %v194, %v198
    %v200 = vadd.s32 %v199, 536870912
    %v201 = vshrl.u32 %v200, 30
    %v202 = vshll.u32 %v201, 30
    %v203 = vsub.s32 %v199, %v202
    %vm204 = vcmp.lt.s32.totalorder %v203, 0
    %v205 = vsub.s32 0, %v203
    %v206 = vsel %vm204, %v205, %v203
    %v207 = vclz %v206
    %v208 = vsub.s32 %v207, 2
    %vm209 = vcmp.gt.s32.totalorder 0, %v208
    %v210 = vsel %vm209, 0, %v208
    %v211 = vsub.s32 32, %v210
    %v212 = vshll.u32 %v203, %v210
    %v213 = vshrl.u32 %v195, %v211
    %v214 = vor.u32 %v212, %v213
    %v215 = vsub.s32 4294967266, %v210
    %v216 = vadd.s32 %v215, 127
    %v217 = vshll.u32 %v216, 23
    %v218 = vor.u32 4788187, %v217
    %v219 = vand.u32 2147483647, %v218
    %v221 = vcvt.s32.f32 %v214
    %v222 = vmul.f32 %v221, %v219
    %v223 = vxor.u32 %v222, 2147483648
    %v224 = vsel %vm103, %v223, %v222
    %v225 = vsub.s32 4, %v201
    %v226 = vsel %vm103, %v225, %v201
    %v227 = vsel %vm102, %v99, %v224
    %v228 = vsel %vm102, 0, %v226
    %v229 = vmul.f32 %v227, %v227
    %v230 = vmul.f32 %v229, -0.001358992
    %v231 = vadd.f32 %v230, 0.041655596
    %v232 = vmul.f32 %v229, %v231
    %v233 = vadd.f32 %v232, -0.4999988
    %v234 = vmul.f32 %v229, %v233
    %v235 = vadd.f32 1.0, %v234
    %v236 = vmul.f32 %v227, %v227
    %v237 = vmul.f32 %v236, -0.00019511016
    %v238 = vadd.f32 %v237, 0.008332121
    %v239 = vmul.f32 %v236, %v238
    %v240 = vadd.f32 %v239, -0.16666654
    %v241 = vmul.f32 %v236, %v240
    %v242 = vadd.f32 %v241, 1.0
    %v243 = vmul.f32 %v242, %v227
    %vm244 = vweird.f32 %v99
    %v245 = vadd.s32 %v228, 3
    %v246 = vand.u32 %v245, 3
    %vm247 = vcmp.lt.s32.totalorder %v246, 2
    %vm248 = vcmp.eq.s32.totalorder %v246, 0
    %v249 = vxor.u32 %v243, 2147483648
    %v250 = vsel %vm248, %v235, %v249
    %vm251 = vcmp.eq.s32.totalorder %v246, 2
    %v252 = vxor.u32 %v235, 2147483648
    %v253 = vsel %vm251, %v252, %v243
    %v254 = vsel %vm247, %v250, %v253
    %v255 = vsel %vm244, nan, %v254
    %v256 = vand.u32 2147483647, %v100
    %vm257 = vcmp.le.f32.partialorder %v256, 0.7853982
    %vm258 = vcmp.lt.s32.totalorder %v100, 0
    %v259 = vand.u32 %v100, 2139095040
    %v260 = vshrl.u32 %v259, 23
    %v261 = vsub.s32 %v260, 127
    %v262 = vand.u32 2147483647, %v100
    %v263 = vand.u32 %v262, 8388607
    %v264 = vor.u32 %v263, 8388608
    %v265 = vsub.s32 0, %v264
    %v266 = vadd.s32 %v261, 1
    %vm267 = vcmp.gt.s32.totalorder %v266, 0
    %v268 = vsel %vm267, %v266, 0
    %v269 = vshrl.u32 %v268, 5
    %v270 = vand.u32 %v268, 31
    %v271 = vsub.s32 32, %v270
    %v272 = vshrl.u32 683565275, %v271
    %v273 = vshll.u32 683565275, %v270
    %v274 = vshrl.u32 2475754826, %v271
    %v275 = vor.u32 %v273, %v274
    %v276 = vshll.u32 2475754826, %v270
    %v277 = vshrl.u32 2131351028, %v271
    %v278 = vor.u32 %v276, %v277
    %v279 = vshll.u32 2131351028, %v270
    %v280 = vshrl.u32 2102212464, %v271
    %v281 = vor.u32 %v279, %v280
    %v282 = vshll.u32 2102212464, %v270
    %v283 = vshrl.u32 920167782, %v271
    %v284 = vor.u32 %v282, %v283
    %v285 = vshll.u32 920167782, %v270
    %v286 = vshrl.u32 1326507024, %v271
    %v287 = vor.u32 %v285, %v286
    %vm288 = vcmp.lt.s32.totalorder %v269, 1
    %vm289 = vcmp.lt.s32.totalorder %v269, 2
    %vm290 = vcmp.lt.s32.totalorder %v269, 3
    %vm291 = vcmp.lt.s32.totalorder %v269, 4
    %v292 = vsel %vm288, %v272, %v275
    %v293 = vsel %vm291, %v281, 2102212464
    %v294 = vsel %vm290, %v278, %v293
    %v295 = vsel %vm289, %v292, %v294
    %v296 = vsel %vm288, %v275, %v278
    %v297 = vsel %vm291, %v284, 920167782
    %v298 = vsel %vm290, %v281, %v297
    %v299 = vsel %vm289, %v296, %v298
    %v300 = vsel %vm288, %v278, %v281
    %v301 = vsel %vm291, %v287, 1326507024
    %v302 = vsel %vm290, %v284, %v301
    %v303 = vsel %vm289, %v300, %v302
    %v304 = vshll.u32 %v264, 8
    %v305 = vand.u32 %v304, 65535
    %v306 = vshrl.u32 %v304, 16
    %v307 = vand.u32 %v303, 65535
    %v308 = vshrl.u32 %v303, 16
    %v309 = vmul.u32 %v305, %v307
    %v310 = vmul.u32 %v305, %v308
    %v311 = vmul.u32 %v306, %v307
    %v312 = vmul.u32 %v306, %v308
    %v313 = vshll.u32 %v310, 16
    %v314 = vshrl.u32 %v310, 16
    %v315 = vshll.u32 %v311, 16
    %v316 = vshrl.u32 %v311, 16
    %vm317 = vc.u32 %v309, %v313
    %v318 = vsel %vm317, 1, 0
    %v319 = vadd.s32 %v309, %v313
    %v320 = vadd.s32 %v312, %v318
    %vm321 = vc.u32 %v319, %v315
    %v322 = vsel %vm321, 1, 0
    %v323 = vadd.s32 %v319, %v315
    %v324 = vadd.s32 %v320, %v322
    %v325 = vadd.s32 %v324, %v314
    %v326 = vadd.s32 %v325, %v316
    %v327 = vand.u32 %v304, 65535
    %v328 = vshrl.u32 %v304, 16
    %v329 = vand.u32 %v299, 65535
    %v330 = vshrl.u32 %v299, 16
    %v331 = vmul.u32 %v327, %v329
    %v332 = vmul.u32 %v327, %v330
    %v333 = vmul.u32 %v328, %v329
    %v334 = vmul.u32 %v328, %v330
    %v335 = vshll.u32 %v332, 16
    %v336 = vshrl.u32 %v332, 16
    %v337 = vshll.u32 %v333, 16
    %v338 = vshrl.u32 %v333, 16
    %vm339 = vc.u32 %v331, %v335
    %v340 = vsel %vm339, 1, 0
    %v341 = vadd.s32 %v331, %v335
    %v342 = vadd.s32 %v334, %v340
    %vm343 = vc.u32 %v341, %v337
    %v344 = vsel %vm343, 1, 0
    %v345 = vadd.s32 %v341, %v337
    %v346 = vadd.s32 %v342, %v344
    %v347 = vadd.s32 %v346, %v336
    %v348 = vadd.s32 %v347, %v338
    %v349 = vmul.u32 %v304, %v295
    %v350 = vadd.s32 %v326, %v345
    %vm351 = vc.u32 %v326, %v345
    %v352 = vadd.s32 %v348, 1
    %v353 = vsel %vm351, %v352, %v348
    %v354 = vadd.s32 %v349, %v353
    %v355 = vadd.s32 %v354, 536870912
    %v356 = vshrl.u32 %v355, 30
    %v357 = vshll.u32 %v356, 30
    %v358 = vsub.s32 %v354, %v357
    %vm359 = vcmp.lt.s32.totalorder %v358, 0
    %v360 = vsub.s32 0, %v358
    %v361 = vsel %vm359, %v360, %v358
    %v362 = vclz %v361
    %v363 = vsub.s32 %v362, 2
    %vm364 = vcmp.gt.s32.totalorder 0, %v363
    %v365 = vsel %vm364, 0, %v363
    %v366 = vsub.s32 32, %v365
    %v367 = vshll.u32 %v358, %v365
    %v368 = vshrl.u32 %v350, %v366
    %v369 = vor.u32 %v367, %v368
    %v370 = vsub.s32 4294967266, %v365
    %v371 = vadd.s32 %v370, 127
    %v372 = vshll.u32 %v371, 23
    %v373 = vor.u32 4788187, %v372
    %v374 = vand.u32 2147483647, %v373
    %v376 = vcvt.s32.f32 %v369
    %v377 = vmul.f32 %v376, %v374
    %v378 = vxor.u32 %v377, 2147483648
    %v379 = vsel %vm258, %v378, %v377
    %v380 = vsub.s32 4, %v356
    %v381 = vsel %vm258, %v380, %v356
    %v382 = vsel %vm257, %v100, %v379
    %v383 = vsel %vm257, 0, %v381
    %v384 = vmul.f32 %v382, %v382
    %v385 = vmul.f32 %v384, -0.001358992
    %v386 = vadd.f32 %v385, 0.041655596
    %v387 = vmul.f32 %v384, %v386
    %v388 = vadd.f32 %v387, -0.4999988
    %v389 = vmul.f32 %v384, %v388
    %v390 = vadd.f32 1.0, %v389
    %v391 = vmul.f32 %v382, %v382
    %v392 = vmul.f32 %v391, -0.00019511016
    %v393 = vadd.f32 %v392, 0.008332121
    %v394 = vmul.f32 %v391, %v393
    %v395 = vadd.f32 %v394, -0.16666654
    %v396 = vmul.f32 %v391, %v395
    %v397 = vadd.f32 %v396, 1.0
    %v398 = vmul.f32 %v397, %v382
    %vm399 = vweird.f32 %v100
    %v400 = vadd.s32 %v383, 3
    %v401 = vand.u32 %v400, 3
    %vm402 = vcmp.lt.s32.totalorder %v401, 2
    %vm403 = vcmp.eq.s32.totalorder %v401, 0
    %v404 = vxor.u32 %v398, 2147483648
    %v405 = vsel %vm403, %v390, %v404
    %vm406 = vcmp.eq.s32.totalorder %v401, 2
    %v407 = vxor.u32 %v390, 2147483648
    %v408 = vsel %vm406, %v407, %v398
    %v409 = vsel %vm402, %v405, %v408
    %v410 = vsel %vm399, nan, %v409
    %413 = vset.pattern.permute.xlu0 0
    %414 = vperm.xlu0 %413, %v255
    %v415 = vpop.permute.xlu0 %414
    %416 = vset.pattern.permute.xlu0 0
    %417 = vperm.xlu0 %416, %v410
    %v418 = vpop.permute.xlu0 %417
    %v419 = vperm.slane %v415, %v68
    %v420 = vperm.slane %v418, %v68
    %v421 = vsel %vm71, %v420, %v419
    %423 = vst.msk [vmem:[#allocation8] sm:$0x3] %vm77, %v421
    // Predicated region
    $region18: #{tpu_custom_call.1} parent=1 // pred_check
      _
    $region19: #{tpu_custom_call.1} parent=1 // pred_check_branch
      %425 = sbr.rel (0) target = $region21
    $region20: #{tpu_custom_call.1} parent=1 // pred_region
      %427 = vsyncadd [#allocation4], 0
      %s429 = sshll.u32 [#allocation7], 4
      %s430 = int_to_ptr.vmem [resolvable:$true] %s429
      %s431 = sshll.u32 %s2, 4
      %s432 = int_to_ptr.hbm [resolvable:$true] %s431
      %434 = dma.vmem_to_hbm [thread:$0]  %s430, 32, %s432, [#allocation4]
    $region21: #{tpu_custom_call.1} parent=1 // pred_fallthru
      _
    // Predicated region
    $region22: #{tpu_custom_call.1} parent=1 // pred_check
      _
    $region23: #{tpu_custom_call.1} parent=1 // pred_check_branch
      %436 = sbr.rel (0) target = $region25
    $region24: #{tpu_custom_call.1} parent=1 // pred_region
      %438 = vsyncadd [#allocation9], 0
      %s440 = sshll.u32 [#allocation8], 4
      %s441 = int_to_ptr.vmem [resolvable:$true] %s440
      %s442 = sshll.u32 %s3, 4
      %s443 = int_to_ptr.hbm [resolvable:$true] %s442
      %445 = dma.vmem_to_hbm [thread:$0]  %s441, 32, %s443, [#allocation9]
    $region25: #{tpu_custom_call.1} parent=1 // pred_fallthru
      _
    // Predicated region
    $region26: #{tpu_custom_call.1} parent=1 // pred_check
      _
    $region27: #{tpu_custom_call.1} parent=1 // pred_check_branch
      %447 = sbr.rel (0) target = $region29
    $region28: #{tpu_custom_call.1} parent=1 // pred_region
      %449 = dma.done [#allocation4], 32
    $region29: #{tpu_custom_call.1} parent=1 // pred_fallthru
      _
    // Predicated region
    $region30: #{tpu_custom_call.1} parent=1 // pred_check
      _
    $region31: #{tpu_custom_call.1} parent=1 // pred_check_branch
      %451 = sbr.rel (0) target = $region33
    $region32: #{tpu_custom_call.1} parent=1 // pred_region
      %453 = dma.done [#allocation9], 32
    $region33: #{tpu_custom_call.1} parent=1 // pred_fallthru
      _
    %454 = vsyncpa [#allocation3], 1
    %455 = vsyncpa [#allocation6], 1
    %456 = vsyncpa [#allocation4], 1
    %457 = vsyncpa [#allocation9], 1

</llo_original>
